<compile_context>
chip_gen: v7x
topology: tpu7x:2x2x1
jax: 0.10.0
libtpu: 0.0.40
codegen_flags: <defaults>
</compile_context>

<pallas_src>
import functools

import jax
import jax.numpy as jnp
from jax.experimental import pallas as pl
from jax.experimental.pallas import tpu as pltpu


def _round_up(x, m):
    return ((x + m - 1) // m) * m


def _tpu_vmem_capacity_bytes():
    try:
        return int(pltpu.get_tpu_info().vmem_capacity_bytes)
    except Exception:
        return 64 * 1024 * 1024  # conservative default: v7x per-TensorCore VMEM


_VMEM_CAP = _tpu_vmem_capacity_bytes()
# Keep headroom for compiler scratch / pipeline slop; never budget > 80 MiB even
# on 128 MiB chips, and ~38 MiB on v7x (64 MiB physical).
_VMEM_BUDGET = min(int(_VMEM_CAP * 0.6), 80 * 1024 * 1024)


def _choose_tm(rows):
    """M tile: one tile for small row counts, else pick from {512,256,128}
    minimizing row padding (prefer larger on ties)."""
    if rows <= 512:
        return _round_up(max(rows, 8), 16)
    best_tm, best_pad = 512, _round_up(rows, 512) - rows
    for tm in (256, 128):
        pad = _round_up(rows, tm) - rows
        if pad < best_pad:
            best_tm, best_pad = tm, pad
    return best_tm


# ----------------------------- Pallas kernels -------------------------------

def _wresident_kernel(*refs, has_bias):
    """Whole-K matmul: W panel (d_in_p, tn) is resident; one MXU dot per tile."""
    if has_bias:
        x_ref, wt_ref, b_ref, o_ref = refs
    else:
        x_ref, wt_ref, o_ref = refs
        b_ref = None
    out = jnp.dot(x_ref[...].astype(jnp.bfloat16), wt_ref[...],
                  preferred_element_type=jnp.float32)
    if has_bias:
        out = out + b_ref[...].astype(jnp.float32)
    o_ref[...] = out.astype(o_ref.dtype)


def _ktiled_kernel(*refs, has_bias, n_k):
    """3-D tiled matmul with f32 VMEM accumulator (used when W doesn't fit VMEM)."""
    if n_k > 1:
        *io_refs, acc_ref = refs
    else:
        io_refs, acc_ref = refs, None
    if has_bias:
        x_ref, wt_ref, b_ref, o_ref = io_refs
    else:
        x_ref, wt_ref, o_ref = io_refs
        b_ref = None

    p = jnp.dot(x_ref[...].astype(jnp.bfloat16), wt_ref[...],
                preferred_element_type=jnp.float32)

    if n_k == 1:
        if has_bias:
            p = p + b_ref[...].astype(jnp.float32)
        o_ref[...] = p.astype(o_ref.dtype)
        return

    k = pl.program_id(2)

    @pl.when(k == 0)
    def _():
        acc_ref[...] = p

    @pl.when(jnp.logical_and(k > 0, k < n_k - 1))
    def _():
        acc_ref[...] = acc_ref[...] + p

    @pl.when(k == n_k - 1)
    def _():
        out = acc_ref[...] + p               # fold last partial straight into writeback
        if has_bias:
            out = out + b_ref[...].astype(jnp.float32)
        o_ref[...] = out.astype(o_ref.dtype)


# ------------------------------ matmul wrapper -------------------------------

def _snnfc_matmul(x2d, wt_p, b_p, d_out, *, force_ktiled=False, tk_cap=2048):
    """x2d: (rows, d_in) native dtype; wt_p: (d_in_p, d_out_p) bf16 pre-padded;
    b_p: (1, d_out_p) f32 or None. Returns (rows, d_out) in x2d.dtype."""
    rows, d_in = x2d.shape
    d_in_p, d_out_p = wt_p.shape
    has_bias = b_p is not None
    out_dtype = x2d.dtype
    isz_x = jnp.dtype(x2d.dtype).itemsize
    isz_o = jnp.dtype(out_dtype).itemsize

    tm = _choose_tm(rows)
    rows_p = _round_up(rows, tm)

    # Pad x only when ragged; no bf16 materialization (cast happens in-kernel).
    if rows_p != rows or d_in_p != d_in:
        x_in = jnp.pad(x2d, ((0, rows_p - rows), (0, d_in_p - d_in)))
    else:
        x_in = x2d

    def tn_candidates(cap):
        return [t for t in (1024, 512, 256, 128)
                if t <= cap and t <= d_out_p and d_out_p % t == 0]

    mib = 1024 * 1024

    # ---------------- Path A: weight panel resident across the row loop -------
    def resident_bytes(tn):
        return (2 * tm * d_in_p * isz_x            # x double-buffered
                + 2 * d_in_p * tn * 2              # W panel (bf16)
                + 2 * tm * tn * isz_o              # output
                + (2 * tn * 4 if has_bias else 0))

    chosen_tn = None
    if not force_ktiled:
        for tn in tn_candidates(1024):
            if resident_bytes(tn) <= _VMEM_BUDGET:
                chosen_tn = tn
                break

    if chosen_tn is not None:
        tn = chosen_tn
        # v7x has 2 TensorCores: avoid a 1x1 parallel grid when d_out is splittable.
        if (rows_p // tm) * (d_out_p // tn) == 1 and d_out_p % 256 == 0:
            tn = d_out_p // 2

        inputs = [x_in, wt_p]
        in_specs = [
            pl.BlockSpec((tm, d_in_p), lambda j, i: (i, 0)),
            pl.BlockSpec((d_in_p, tn), lambda j, i: (0, j)),   # constant across i -> no re-DMA
        ]
        if has_bias:
            inputs.append(b_p)
            in_specs.append(pl.BlockSpec((1, tn), lambda j, i: (0, j)))

        est = resident_bytes(tn)
        out_p = pl.pallas_call(
            functools.partial(_wresident_kernel, has_bias=has_bias),
            out_shape=jax.ShapeDtypeStruct((rows_p, d_out_p), out_dtype),
            grid_spec=pltpu.PrefetchScalarGridSpec(
                num_scalar_prefetch=0,
                grid=(d_out_p // tn, rows_p // tm),   # N outer, M inner
                in_specs=in_specs,
                out_specs=pl.BlockSpec((tm, tn), lambda j, i: (i, j)),
            ),
            compiler_params=pltpu.CompilerParams(
                dimension_semantics=("parallel", "parallel"),
                vmem_limit_bytes=int(min(_VMEM_CAP, max(32 * mib, est + 16 * mib))),
            ),
        )(*inputs)
    else:
        # ---------------- Path B: classic 3-D K-tiled matmul ---------------------
        tn = tn_candidates(512)[0]
        tk_list = [t for t in (2048, 1024, 512, 256, 128)
                   if t <= tk_cap and t <= d_in_p and d_in_p % t == 0]

        def ktiled_bytes(tn_, tk_):
            return (2 * tm * tk_ * isz_x
                    + 2 * tk_ * tn_ * 2
                    + 2 * tm * tn_ * isz_o
                    + tm * tn_ * 4                      # acc scratch
                    + (2 * tn_ * 4 if has_bias else 0))

        tk = tk_list[-1]
        for cand in tk_list:
            if ktiled_bytes(tn, cand) <= _VMEM_BUDGET:
                tk = cand
                break
        n_k = d_in_p // tk

        inputs = [x_in, wt_p]
        in_specs = [
            pl.BlockSpec((tm, tk), lambda i, j, k: (i, k)),
            pl.BlockSpec((tk, tn), lambda i, j, k: (k, j)),
        ]
        if has_bias:
            inputs.append(b_p)
            in_specs.append(pl.BlockSpec((1, tn), lambda i, j, k: (0, j)))
        scratch = [pltpu.VMEM((tm, tn), jnp.float32)] if n_k > 1 else []

        est = ktiled_bytes(tn, tk)
        out_p = pl.pallas_call(
            functools.partial(_ktiled_kernel, has_bias=has_bias, n_k=n_k),
            out_shape=jax.ShapeDtypeStruct((rows_p, d_out_p), out_dtype),
            grid_spec=pltpu.PrefetchScalarGridSpec(
                num_scalar_prefetch=0,
                grid=(rows_p // tm, d_out_p // tn, n_k),
                in_specs=in_specs,
                out_specs=pl.BlockSpec((tm, tn), lambda i, j, k: (i, j)),
                scratch_shapes=scratch,
            ),
            compiler_params=pltpu.CompilerParams(
                dimension_semantics=("parallel", "parallel", "arbitrary"),
                vmem_limit_bytes=int(min(_VMEM_CAP, max(32 * mib, est + 16 * mib))),
            ),
        )(*inputs)

    if rows_p == rows and d_out_p == d_out:
        return out_p
    return out_p[:rows, :d_out]


# ------------------------------ SNNFC module --------------------------------

class SNNFC:
    """JAX/Pallas port of the PyTorch SNNFC forward pass (inference)."""

    def __init__(self, d_in, d_out, bias=False, need_resize=False, sizes=None,
                 dropout=0.0, key=None):
        self.d_in = d_in
        self.d_out = d_out
        self.need_resize = need_resize
        self.sizes = list(sizes) if sizes is not None else None
        # TODO(synk): training-mode dropout (p>0) not implemented; p=0 / eval mode is identity.
        self.dropout = dropout
        if key is None:
            key = jax.random.PRNGKey(0)

        # _initialize_weights(): uniform(-1, 1), then each output row / its L2 norm.
        w = jax.random.uniform(key, (d_out, d_in), dtype=jnp.float32,
                               minval=-1.0, maxval=1.0)
        w = w / jnp.sqrt(jnp.sum(w * w, axis=1, keepdims=True))
        self.weight = w                                   # (d_out, d_in), f32 reference param
        self.bias = jnp.zeros((d_out,), jnp.float32) if bias else None

        # MXU-ready weight: transpose, cast bf16, lane-dense pad (mult of 128) once.
        # NOTE: bf16 MXU operands (f32 accumulate) deviate slightly from PyTorch f32 Linear.
        d_in_p = _round_up(d_in, 128)
        d_out_p = _round_up(d_out, 128)
        wt = jnp.transpose(self.weight).astype(jnp.bfloat16)       # (d_in, d_out)
        if (d_in_p, d_out_p) != (d_in, d_out):
            wt = jnp.pad(wt, ((0, d_in_p - d_in), (0, d_out_p - d_out)))
        self._wt_p = wt
        if self.bias is not None:
            b = self.bias.reshape(1, d_out)
            if d_out_p != d_out:
                b = jnp.pad(b, ((0, 0), (0, d_out_p - d_out)))
            self._b_p = b
        else:
            self._b_p = None

    def _fc(self, x2d):
        return _snnfc_matmul(x2d, self._wt_p, self._b_p, self.d_out)

    def __call__(self, x):
        return self.forward(x)

    def forward(self, x):
        if self.need_resize:
            if self.sizes is None:
                sizes = x.shape
                b = sizes[0]
                y = self._fc(x.reshape(b, -1)).reshape(sizes)
            else:
                b = x.shape[0]
                sizes = list(self.sizes)
                sizes[0] = b
                y = self._fc(x.reshape(b, -1)).reshape(sizes)
        else:
            lead = x.shape[:-1]
            y = self._fc(x.reshape(-1, x.shape[-1])).reshape(*lead, self.d_out)
        # Dropout with p=0.0 (module default) / eval mode is identity.
        return y

    def forward_linear(self, x):
        return self.forward(x)


# --------------------------------- main --------------------------------------

if __name__ == "__main__":
    key = jax.random.PRNGKey(0)
    k_w, k_x = jax.random.split(key)

    batch, seq, d_in, d_out = 2, 8, 32, 32
    x = jax.random.normal(k_x, (batch, seq, d_in), dtype=jnp.float32)

    # 1) no-bias path (module default) -> weight-resident kernel
    mod = SNNFC(d_in, d_out, bias=False, need_resize=False, dropout=0.0, key=k_w)
    out = jax.block_until_ready(mod(x))
    ref = jnp.einsum("bsd,od->bso", x, mod.weight)
    assert out.shape == (batch, seq, d_out)
    assert jnp.allclose(out, ref, atol=5e-2, rtol=5e-2)

    # 2) bias path (bias init to zero -> same reference); exercises fused bias add
    mod_b = SNNFC(d_in, d_out, bias=True, need_resize=False, dropout=0.0, key=k_w)
    out_b = jax.block_until_ready(mod_b(x))
    assert jnp.allclose(out_b, ref, atol=5e-2, rtol=5e-2)

    # 3) need_resize path: flatten (B, 4, 16) -> (B, 64), fc, reshape back
    xr = jax.random.normal(jax.random.PRNGKey(1), (2, 4, 16), dtype=jnp.float32)
    mod_r = SNNFC(64, 64, bias=False, need_resize=True, sizes=None,
                  dropout=0.0, key=jax.random.PRNGKey(2))
    out_r = jax.block_until_ready(mod_r(xr))
    ref_r = (xr.reshape(2, -1) @ mod_r.weight.T).reshape(xr.shape)
    assert out_r.shape == xr.shape
    assert jnp.allclose(out_r, ref_r, atol=5e-2, rtol=5e-2)

    # 4) exercise the K-tiled accumulation fallback (used when W doesn't fit VMEM)
    d_in2, d_out2, rows2 = 256, 64, 32
    mod2 = SNNFC(d_in2, d_out2, bias=False, key=jax.random.PRNGKey(3))
    x2 = jax.random.normal(jax.random.PRNGKey(4), (rows2, d_in2), dtype=jnp.float32)
    out2 = jax.block_until_ready(
        _snnfc_matmul(x2, mod2._wt_p, None, d_out2, force_ktiled=True, tk_cap=128))
    ref2 = x2 @ mod2.weight.T
    assert out2.shape == (rows2, d_out2)
    assert jnp.allclose(out2, ref2, atol=5e-2, rtol=5e-2)

    print("KERNEL_OK")
</pallas_src>

<mosaic_0001>
module attributes {stable_mosaic.version = 11 : i64} {
  func.func @_wresident_kernel(%arg0: i32, %arg1: i32, %arg2: memref<16x128xf32, #tpu.memory_space<vmem>>, %arg3: memref<128x128xbf16, #tpu.memory_space<vmem>>, %arg4: memref<16x128xf32, #tpu.memory_space<vmem>>) attributes {dimension_semantics = [#tpu.dimension_semantics<parallel>, #tpu.dimension_semantics<parallel>], iteration_bounds = array<i64: 1, 1>, scalar_prefetch = 0 : i64, scratch_operands = 0 : i64, tpu.core_type = #tpu.core_type<tc>, window_params = [{transform_indices = @transform_0, window_bounds = array<i64: 16, 128>}, {transform_indices = @transform_1, window_bounds = array<i64: 128, 128>}, {transform_indices = @transform_2, window_bounds = array<i64: 16, 128>}]} {
    %c0 = arith.constant 0 : index
    %c0_0 = arith.constant 0 : index
    %0 = vector.load %arg2[%c0, %c0_0] : memref<16x128xf32, #tpu.memory_space<vmem>>, vector<16x128xf32>
    %1 = arith.truncf %0 : vector<16x128xf32> to vector<16x128xbf16>
    %c0_1 = arith.constant 0 : index
    %c0_2 = arith.constant 0 : index
    %2 = vector.load %arg3[%c0_1, %c0_2] : memref<128x128xbf16, #tpu.memory_space<vmem>>, vector<128x128xbf16>
    %cst = arith.constant dense<0.000000e+00> : vector<16x128xf32>
    %3 = tpu.matmul %1, %2, %cst {dimension_numbers = #tpu.dot_dimension_numbers<[1], [0], [0], [1], [0, 0, 1, 1], [], []>} : vector<16x128xbf16>, vector<128x128xbf16>, vector<16x128xf32> -> vector<16x128xf32>
    %c0_3 = arith.constant 0 : index
    %c0_4 = arith.constant 0 : index
    %4 = vector.load %arg4[%c0_3, %c0_4] : memref<16x128xf32, #tpu.memory_space<vmem>>, vector<16x128xf32>
    tpu.vector_store %arg4[%c0_3, %c0_4], %3 {strides = array<i32>} : memref<16x128xf32, #tpu.memory_space<vmem>>, vector<16x128xf32>,
    return
  }
  func.func @transform_0(%arg0: i32, %arg1: i32) -> (i32, i32) {
    %c0_i32 = arith.constant 0 : i32
    %c0_i32_0 = arith.constant 0 : i32
    return %arg1, %c0_i32 : i32, i32
  }
  func.func @transform_1(%arg0: i32, %arg1: i32) -> (i32, i32) {
    %c0_i32 = arith.constant 0 : i32
    %c0_i32_0 = arith.constant 0 : i32
    return %c0_i32, %arg0 : i32, i32
  }
  func.func @transform_2(%arg0: i32, %arg1: i32) -> (i32, i32) {
    %c0_i32 = arith.constant 0 : i32
    return %arg1, %arg0 : i32, i32
  }
}

</mosaic_0001>

<llo_original>
// kernel: tpu_custom_call.1
$region0: #{tpu_custom_call.1}
  #allocation0 [shape = 'u32[]', space=smem, size = 0x4, offset = 0x4, fixed_abs, tag = 'smem constant byte address 0x4 - core index']
  #allocation1 [shape = 'u32[144,128]{1,0:T(1,128)}', space=vmem, size = 0x12000, scoped, tag = 'internal scratch']
  %s0 = inlined_call_operand.hbm [shape: f32[16,128], index: 0, kind: input, shape index: {}]
  %s1 = inlined_call_operand.hbm [shape: bf16[128,128], index: 1, kind: input, shape index: {}]
  %s2 = inlined_call_operand.hbm [shape: f32[16,128], index: 2, kind: output, shape index: {}]
  %s3 = sld [smem:[#allocation0]]
  $region26: #{tpu_custom_call.1} parent=0
    _
  %s5 = ssub.s32 1, %s3
  %s6 = scalar_select 0, %s5, %s3
  $region1: #{tpu_custom_call.1} parent=0
    #allocation2 [shape = 'u8[8192]{0}', space=vmem, size = 0x2000, scoped, tag = 'input window, operand 0, single buffered']
    #allocation3 [shape = 's32[1]{0}', space=sflag, size = 0x4, scoped, tag = 'scoped memory for tpu_custom_call.1']
    #allocation4 [shape = 's32[1]{0}', space=sflag, size = 0x4, scoped, tag = 'scoped memory for tpu_custom_call.1']
    #allocation5 [shape = 'u8[32768]{0}', space=vmem, size = 0x8000, scoped, tag = 'input window, operand 1, single buffered']
    #allocation6 [shape = 's32[1]{0}', space=sflag, size = 0x4, scoped, tag = 'scoped memory for tpu_custom_call.1']
    #allocation7 [shape = 'u8[8192]{0}', space=vmem, size = 0x2000, scoped, tag = 'output window, operand 0, single buffered']
    %7 = vsyncpa [#allocation3], 0
    %8 = vsyncpa [#allocation6], 0
    %9 = vsyncpa [#allocation4], 0
    // Predicated region
    $region2: #{tpu_custom_call.1} parent=1 // pred_check
      _
    $region3: #{tpu_custom_call.1} parent=1 // pred_check_branch
      %11 = sbr.rel (0) target = $region5
    $region4: #{tpu_custom_call.1} parent=1 // pred_region
      %s13 = ssub.s32 256, 256
      %14 = vsyncadd [#allocation3], %s13
      %s15 = sshll.u32 [#allocation2], 4
      %s16 = int_to_ptr.vmem [resolvable:$true] %s15
      %21 = dma.hbm_to_vmem [thread:$0]  %s0, 256, %s16, [#allocation3], 128, 128, 8
    $region5: #{tpu_custom_call.1} parent=1 // pred_fallthru
      _
    // Predicated region
    $region6: #{tpu_custom_call.1} parent=1 // pred_check
      _
    $region7: #{tpu_custom_call.1} parent=1 // pred_check_branch
      %23 = sbr.rel (0) target = $region9
    $region8: #{tpu_custom_call.1} parent=1 // pred_region
      %s25 = ssub.s32 1024, 1024
      %26 = vsyncadd [#allocation6], %s25
      %s27 = sshll.u32 [#allocation5], 4
      %s28 = int_to_ptr.vmem [resolvable:$true] %s27
      %33 = dma.hbm_to_vmem [thread:$0]  %s1, 1024, %s28, [#allocation6], 64, 64, 4
    $region9: #{tpu_custom_call.1} parent=1 // pred_fallthru
      _
    // Predicated region
    $region10: #{tpu_custom_call.1} parent=1 // pred_check
      _
    $region11: #{tpu_custom_call.1} parent=1 // pred_check_branch
      %35 = sbr.rel (0) target = $region13
    $region12: #{tpu_custom_call.1} parent=1 // pred_region
      %36 = dma.done [#allocation3], 256
    $region13: #{tpu_custom_call.1} parent=1 // pred_fallthru
      _
    // Predicated region
    $region14: #{tpu_custom_call.1} parent=1 // pred_check
      _
    $region15: #{tpu_custom_call.1} parent=1 // pred_check_branch
      %38 = sbr.rel (0) target = $region17
    $region16: #{tpu_custom_call.1} parent=1 // pred_region
      %39 = dma.done [#allocation6], 1024
    $region17: #{tpu_custom_call.1} parent=1 // pred_fallthru
      _
    %v41 = vld [vmem:[#allocation2] sm:$0xff]
    %v42 = vld [vmem:[#allocation2 + $0x8] sm:$0xff]
    %v43 = vpack.c.bf16 %v42, %v41
    %v44 = vld [vmem:[#allocation5] sm:$0xf]
    %v45 = vld [vmem:[#allocation5 + $0x4] sm:$0xf]
    %v46 = vld [vmem:[#allocation5 + $0x8] sm:$0xf]
    %v47 = vld [vmem:[#allocation5 + $0xc] sm:$0xf]
    %v48 = vld [vmem:[#allocation5 + $0x10] sm:$0xf]
    %v49 = vld [vmem:[#allocation5 + $0x14] sm:$0xf]
    %v50 = vld [vmem:[#allocation5 + $0x18] sm:$0xf]
    %v51 = vld [vmem:[#allocation5 + $0x1c] sm:$0xf]
    %v52 = vld [vmem:[#allocation5 + $0x20] sm:$0xf]
    %v53 = vld [vmem:[#allocation5 + $0x24] sm:$0xf]
    %v54 = vld [vmem:[#allocation5 + $0x28] sm:$0xf]
    %v55 = vld [vmem:[#allocation5 + $0x2c] sm:$0xf]
    %v56 = vld [vmem:[#allocation5 + $0x30] sm:$0xf]
    %v57 = vld [vmem:[#allocation5 + $0x34] sm:$0xf]
    %v58 = vld [vmem:[#allocation5 + $0x38] sm:$0xf]
    %v59 = vld [vmem:[#allocation5 + $0x3c] sm:$0xf]
    %v76 = vunpack.c.l.b16 %v44
    %v77 = vunpack.c.l.b16 %v45
    %v78 = vunpack.c.l.b16 %v46
    %v79 = vunpack.c.l.b16 %v47
    %v80 = vunpack.c.l.b16 %v48
    %v81 = vunpack.c.l.b16 %v49
    %v82 = vunpack.c.l.b16 %v50
    %v83 = vunpack.c.l.b16 %v51
    %v84 = vunpack.c.l.b16 %v52
    %v85 = vunpack.c.l.b16 %v53
    %v86 = vunpack.c.l.b16 %v54
    %v87 = vunpack.c.l.b16 %v55
    %v88 = vunpack.c.l.b16 %v56
    %v89 = vunpack.c.l.b16 %v57
    %v90 = vunpack.c.l.b16 %v58
    %v91 = vunpack.c.l.b16 %v59
    %v92 = vpack.c.b16 %v77, %v76
    %v93 = vpack.c.b16 %v79, %v78
    %v94 = vpack.c.b16 %v81, %v80
    %v95 = vpack.c.b16 %v83, %v82
    %v96 = vpack.c.b16 %v85, %v84
    %v97 = vpack.c.b16 %v87, %v86
    %v98 = vpack.c.b16 %v89, %v88
    %v99 = vpack.c.b16 %v91, %v90
    %108 = vmatprep.subr.bf16.mxu0 0
    %109 = vmatpush1.bf16.msra.mxu0 %v92
    %110 = vmatprep.subr.bf16.mxu0 0
    %111 = vmatpush1.bf16.msra.mxu0 %v93
    %112 = vmatprep.subr.bf16.mxu0 0
    %113 = vmatpush1.bf16.msra.mxu0 %v94
    %114 = vmatprep.subr.bf16.mxu0 0
    %115 = vmatpush1.bf16.msra.mxu0 %v95
    %116 = vmatprep.subr.bf16.mxu0 0
    %117 = vmatpush1.bf16.msra.mxu0 %v96
    %118 = vmatprep.subr.bf16.mxu0 0
    %119 = vmatpush1.bf16.msra.mxu0 %v97
    %120 = vmatprep.subr.bf16.mxu0 0
    %121 = vmatpush1.bf16.msra.mxu0 %v98
    %122 = vmatprep.subr.bf16.mxu0 0
    %123 = vmatpush1.bf16.msra.mxu0 %v99
    %124 = vmatprep.subr.bf16.mxu0 0
    %125 = vmatpush1.bf16.msra.mxu0 0
    %126 = vmatprep.subr.bf16.mxu0 0
    %127 = vmatpush1.bf16.msra.mxu0 0
    %128 = vmatprep.subr.bf16.mxu0 0
    %129 = vmatpush1.bf16.msra.mxu0 0
    %130 = vmatprep.subr.bf16.mxu0 0
    %131 = vmatpush1.bf16.msra.mxu0 0
    %132 = vmatprep.subr.bf16.mxu0 0
    %133 = vmatpush1.bf16.msra.mxu0 0
    %134 = vmatprep.subr.bf16.mxu0 0
    %135 = vmatpush1.bf16.msra.mxu0 0
    %136 = vmatprep.subr.bf16.mxu0 0
    %137 = vmatpush1.bf16.msra.mxu0 0
    %138 = vmatprep.subr.bf16.mxu0 0
    %139 = vmatpush1.bf16.msra.mxu0 0
    %140 = vmatprep.mubr.bf16.mxu0 0
    %141 = vmatmul.mubr.bf16.gmra.mrb[0].mxu0 %v43
    %v142 = vpop.f32.mrb[0].mxu0
    %v143 = vadd.f32 0.0, %v142
    %v144 = vpop.f32.mrb[0].mxu0
    %v145 = vpop.f32.mrb[0].mxu0
    %v146 = vadd.f32 0.0, %v145
    %v147 = vpop.f32.mrb[0].mxu0
    %148 = vdwg.mxu0
    %149 = vst [vmem:[#allocation7] sm:$0xff] %v143
    %150 = vst [vmem:[#allocation7 + $0x8] sm:$0xff] %v146
    // Predicated region
    $region18: #{tpu_custom_call.1} parent=1 // pred_check
      _
    $region19: #{tpu_custom_call.1} parent=1 // pred_check_branch
      %152 = sbr.rel (0) target = $region21
    $region20: #{tpu_custom_call.1} parent=1 // pred_region
      %s154 = ssub.s32 256, 256
      %155 = vsyncadd [#allocation4], %s154
      %s156 = sshll.u32 [#allocation7], 4
      %s157 = int_to_ptr.vmem [resolvable:$true] %s156
      %162 = dma.vmem_to_hbm [thread:$0]  %s157, 256, %s2, [#allocation4], 128, 128, 8
    $region21: #{tpu_custom_call.1} parent=1 // pred_fallthru
      _
    // Predicated region
    $region22: #{tpu_custom_call.1} parent=1 // pred_check
      _
    $region23: #{tpu_custom_call.1} parent=1 // pred_check_branch
      %164 = sbr.rel (0) target = $region25
    $region24: #{tpu_custom_call.1} parent=1 // pred_region
      %165 = dma.done [#allocation4], 256
    $region25: #{tpu_custom_call.1} parent=1 // pred_fallthru
      _
    %166 = vsyncpa [#allocation3], 1
    %167 = vsyncpa [#allocation6], 1
    %168 = vsyncpa [#allocation4], 1

</llo_original>
